<compile_context>
chip_gen: v5e
topology: v5e:2x2
jax: 0.10.0
libtpu: 0.0.40
codegen_flags: <defaults>
</compile_context>

<pallas_src>
import jax
import jax.numpy as jnp
from jax.experimental import pallas as pl
from jax.experimental.pallas import tpu as pltpu


def _vdn_sum_kernel(q_ref, o_ref):
    # q_ref: (n_agents, block_B)  -- agents on sublanes, batch on lanes.
    # o_ref: (1, block_B)         -- lane-dense output tile.
    o_ref[...] = jnp.sum(q_ref[...], axis=0, keepdims=True)


def mixer_forward(qvalues, states=None, one_hot_actions=None, all_qvalues=None,
                  *, block_b: int = 2048):
    """VDN-style mixing: Q_tot = sum over agents.

    `states`, `one_hot_actions`, `all_qvalues` are accepted to mirror the
    forward contract but are never read, so they are not handed to the kernel
    (no DMA is generated for them).

    Note: for very small batches (tens of rows) a plain
    `jnp.sum(qvalues, axis=-1, keepdims=True)` in the caller is cheaper than a
    pallas_call launch; this wrapper always uses the kernel so it can be tested.
    """
    B, n_agents = qvalues.shape

    # Lane-dense layout: batch on the 128-wide lane axis.
    q_t = qvalues.T  # (n_agents, B)

    # Block sizing: multiple of 128 along lanes, or the full batch extent when
    # the batch is smaller than one block (full-dim blocks are always legal).
    if B < block_b:
        block_b = B
    grid = (pl.cdiv(B, block_b),)

    out = pl.pallas_call(
        _vdn_sum_kernel,
        out_shape=jax.ShapeDtypeStruct((1, B), qvalues.dtype),
        grid=grid,
        in_specs=[pl.BlockSpec((n_agents, block_b), lambda i: (0, i))],
        out_specs=pl.BlockSpec((1, block_b), lambda i: (0, i)),
        compiler_params=pltpu.CompilerParams(
            dimension_semantics=("parallel",),  # shard batch across TCs (v7x)
        ),
    )(q_t)

    return out.reshape(B, 1)


if __name__ == "__main__":
    key = jax.random.PRNGKey(0)
    n_agents, state_size, n_actions = 4, 16, 6

    # (batch_size, block_b override) — covers full blocks, ragged tail blocks,
    # and the small full-extent-block path.
    cases = [(1024, 512), (520, 256), (200, 2048)]

    for B, blk in cases:
        k1, k2, k3, k4 = jax.random.split(jax.random.fold_in(key, B), 4)

        qvalues = jax.random.normal(k1, (B, n_agents), dtype=jnp.float32)
        states = jax.random.normal(k2, (B, state_size), dtype=jnp.float32)
        actions = jax.random.randint(k3, (B, n_agents), 0, n_actions)
        one_hot_actions = jax.nn.one_hot(actions, n_actions, dtype=jnp.float32)
        all_qvalues = jax.random.normal(k4, (B, n_agents, n_actions),
                                        dtype=jnp.float32)

        out = mixer_forward(qvalues, states, one_hot_actions, all_qvalues,
                            block_b=blk)
        out = jax.block_until_ready(out)

        ref = jnp.sum(qvalues, axis=-1, keepdims=True)
        assert out.shape == (B, 1), (B, out.shape)
        assert jnp.allclose(out, ref, atol=1e-5, rtol=1e-5), (B, out, ref)

    print("KERNEL_OK")
</pallas_src>

<mosaic_0001>
module attributes {stable_mosaic.version = 11 : i64} {
  func.func @_vdn_sum_kernel(%arg0: i32, %arg1: memref<4x512xf32, #tpu.memory_space<vmem>>, %arg2: memref<1x512xf32, #tpu.memory_space<vmem>>) attributes {dimension_semantics = [#tpu.dimension_semantics<parallel>], iteration_bounds = array<i64: 2>, scalar_prefetch = 0 : i64, scratch_operands = 0 : i64, tpu.core_type = #tpu.core_type<tc>, window_params = [{transform_indices = @transform_0, window_bounds = array<i64: 4, 512>}, {transform_indices = @transform_1, window_bounds = array<i64: 1, 512>}]} {
    %c0 = arith.constant 0 : index
    %c0_0 = arith.constant 0 : index
    %0 = vector.load %arg1[%c0, %c0_0] : memref<4x512xf32, #tpu.memory_space<vmem>>, vector<4x512xf32>
    %cst = arith.constant dense<0.000000e+00> : vector<512xf32>
    %1 = vector.multi_reduction <add>, %0, %cst [0] : vector<4x512xf32> to vector<512xf32>
    %2 = vector.shape_cast %1 : vector<512xf32> to vector<1x512xf32>
    %c0_1 = arith.constant 0 : index
    %c0_2 = arith.constant 0 : index
    %3 = vector.load %arg2[%c0_1, %c0_2] : memref<1x512xf32, #tpu.memory_space<vmem>>, vector<1x512xf32>
    tpu.vector_store %arg2[%c0_1, %c0_2], %2 {strides = array<i32>} : memref<1x512xf32, #tpu.memory_space<vmem>>, vector<1x512xf32>,
    return
  }
  func.func @transform_0(%arg0: i32) -> (i32, i32) {
    %c0_i32 = arith.constant 0 : i32
    %c0_i32_0 = arith.constant 0 : i32
    return %c0_i32, %arg0 : i32, i32
  }
  func.func @transform_1(%arg0: i32) -> (i32, i32) {
    %c0_i32 = arith.constant 0 : i32
    %c0_i32_0 = arith.constant 0 : i32
    return %c0_i32, %arg0 : i32, i32
  }
}

</mosaic_0001>

<llo_original>
// kernel: tpu_custom_call.1
$region0: #{tpu_custom_call.1}
  #allocation0 [shape = 'u32[]', space=smem, size = 0x4, offset = 0x4, fixed_abs, tag = 'smem constant byte address 0x4 - core index']
  #allocation1 [shape = 'u32[72,128]{1,0:T(1,128)}', space=vmem, size = 0x9000, scoped, tag = 'internal scratch']
  %s0 = inlined_call_operand.hbm [shape: f32[4,1024], index: 0, kind: input, shape index: {}]
  %s1 = inlined_call_operand.hbm [shape: f32[1,1024], index: 1, kind: output, shape index: {}]
  %s2 = sld [smem:[#allocation0]]
  $region41: #{tpu_custom_call.1} parent=0
    _
  %s4 = ssub.s32 1, %s2
  %s5 = scalar_select 0, %s4, %s2
  $region1: #{tpu_custom_call.1} parent=0
    #allocation2 [shape = 'u8[16384]{0}', space=vmem, size = 0x4000, scoped, tag = 'input window, operand 0']
    #allocation3 [shape = 's32[2]{0}', space=sflag, size = 0x8, scoped, tag = 'scoped memory for tpu_custom_call.1']
    #allocation4 [shape = 's32[2]{0}', space=sflag, size = 0x8, scoped, tag = 'scoped memory for tpu_custom_call.1']
    #allocation5 [shape = 'u8[4096]{0}', space=vmem, size = 0x1000, scoped, tag = 'output window, operand 0']
    %6 = vsyncpa [#allocation3], 0
    %s7 = scalar_lea.sflag [#allocation3], 1
    %8 = vsyncpa %s7, 0
    %9 = vsyncpa [#allocation4], 0
    %s10 = scalar_lea.sflag [#allocation4], 1
    %11 = vsyncpa %s10, 0
    loop: start=0, step=1, limit=4
    $region2: #{tpu_custom_call.1} parent=1 // loop_pre_header
      _
    $region3: #{tpu_custom_call.1} parent=1 // loop_header
      %s13 = sphi 0, %s17
      %p14 = scmp.ge.s32.totalorder %s13, 4
      %s23 = sphi 0, %s25
      %s26 = sphi 0, %s23
      %s27 = sphi 0, %s26
      %s43 = sphi 0, %s27
      %s49 = sphi 0, %s51
      %s52 = sphi 0, %s49
      %s53 = sphi 0, %s52
      %s69 = sphi 0, %s53
    $region4: #{tpu_custom_call.1} parent=1 // loop_header_branch
      %16 = sbr.rel (%p14) target = $region8
    $region5: #{tpu_custom_call.1} parent=1 // loop_body
      %s18 = ssub.s32 %s13, 1
      %s19 = ssub.s32 %s13, 2
      %s20 = sadd.s32 %s13, 1
      %s21 = ssub.s32 %s13, %s20
      %p22 = scmp.eq.s32.totalorder %s21, 0
      %s24 = sadd.s32 %s23, 1
      %s25 = scalar_select %p22, %s23, %s24
      %p28 = pneg %p22
      %p29 = scmp.eq.s32.totalorder %s13, 1
      %p30 = por %p28, %p29
      %p31 = scmp.ne.s32.totalorder %s23, %s26
      %p32 = scmp.eq.s32.totalorder %s13, 0
      %p33 = por %p31, %p32
      %p34 = scmp.ne.s32.totalorder %s23, %s26
      %p35 = scmp.eq.s32.totalorder %s18, 1
      %p36 = por %p34, %p35
      %p37 = scmp.ne.s32.totalorder %s26, %s27
      %p38 = scmp.eq.s32.totalorder %s18, 0
      %p39 = por %p37, %p38
      %p40 = scmp.ne.s32.totalorder %s26, %s27
      %p41 = scmp.eq.s32.totalorder %s19, 1
      %p42 = por %p40, %p41
      %p44 = scmp.ne.s32.totalorder %s27, %s43
      %p45 = scmp.eq.s32.totalorder %s19, 0
      %p46 = por %p44, %p45
      %s47 = ssub.s32 %s13, %s20
      %p48 = scmp.eq.s32.totalorder %s47, 0
      %s50 = sadd.s32 %s49, 1
      %s51 = scalar_select %p48, %s49, %s50
      %p54 = pneg %p48
      %p55 = scmp.eq.s32.totalorder %s13, 1
      %p56 = por %p54, %p55
      %p57 = scmp.ne.s32.totalorder %s49, %s52
      %p58 = scmp.eq.s32.totalorder %s13, 0
      %p59 = por %p57, %p58
      %p60 = scmp.ne.s32.totalorder %s49, %s52
      %p61 = scmp.eq.s32.totalorder %s18, 1
      %p62 = por %p60, %p61
      %p63 = scmp.ne.s32.totalorder %s52, %s53
      %p64 = scmp.eq.s32.totalorder %s18, 0
      %p65 = por %p63, %p64
      %p66 = scmp.ne.s32.totalorder %s52, %s53
      %p67 = scmp.eq.s32.totalorder %s19, 1
      %p68 = por %p66, %p67
      %p70 = scmp.ne.s32.totalorder %s53, %s69
      %p71 = scmp.eq.s32.totalorder %s19, 0
      %p72 = por %p70, %p71
      %p73 = scmp.le.s32.totalorder 1, %s13
      %p74 = scmp.lt.s32.totalorder %s13, 3
      %p75 = pnand %p73, %p74
      %p76 = pneg %p75
      // Predicated region
      $region9: #{tpu_custom_call.1} parent=5 // pred_check
        _
      $region10: #{tpu_custom_call.1} parent=5 // pred_check_branch
        %78 = sbr.rel (%p75) target = $region12
      $region11: #{tpu_custom_call.1} parent=5 // pred_region
        %s79 = ssub.s32 %s13, 1
      $region12: #{tpu_custom_call.1} parent=5 // pred_fallthru
        _
      %p80 = scmp.lt.s32.totalorder %s13, 2
      // Predicated region
      $region13: #{tpu_custom_call.1} parent=5 // pred_check
        %p81 = pneg %p80
      $region14: #{tpu_custom_call.1} parent=5 // pred_check_branch
        %83 = sbr.rel (%p81) target = $region16
      $region15: #{tpu_custom_call.1} parent=5 // pred_region
        // Predicated region
        $region17: #{tpu_custom_call.1} parent=15 // pred_check
          %p84 = pneg %p33
        $region18: #{tpu_custom_call.1} parent=15 // pred_check_branch
          %86 = sbr.rel (%p84) target = $region20
        $region19: #{tpu_custom_call.1} parent=15 // pred_region
          %s87 = sand.u32 %s23, 1
          %s88 = scalar_lea.sflag [#allocation3], %s87
          %s89 = sand.u32 %s23, 1
          %s90 = smul.addr %s89, 16
          %s91 = scalar_lea.vmem [#allocation2], %s90
          %s92 = smul.u32 4, %s13
          %94 = vsyncadd %s88, 0
          %s95 = smul.addr %s92, 4
          %s96 = scalar_lea.hbm %s0, %s95
          %s98 = sshll.u32 %s96, 4
          %s99 = int_to_ptr.hbm [resolvable:$true] %s98
          %s100 = sshll.u32 %s91, 4
          %s101 = int_to_ptr.vmem [resolvable:$true] %s100
          %103 = dma.hbm_to_vmem [thread:$0]  %s99, 256, %s101, %s88
        $region20: #{tpu_custom_call.1} parent=15 // pred_fallthru
          _
      $region16: #{tpu_custom_call.1} parent=5 // pred_fallthru
        _
      %p104 = scmp.le.s32.totalorder 1, %s13
      %p105 = scmp.lt.s32.totalorder %s13, 3
      %p106 = pnand %p104, %p105
      %p107 = pneg %p106
      // Predicated region
      $region21: #{tpu_custom_call.1} parent=5 // pred_check
        _
      $region22: #{tpu_custom_call.1} parent=5 // pred_check_branch
        %109 = sbr.rel (%p106) target = $region24
      $region23: #{tpu_custom_call.1} parent=5 // pred_region
        %s110 = ssub.s32 %s13, 1
        %s111 = sand.u32 %s26, 1
        %s112 = scalar_lea.sflag [#allocation3], %s111
        %s113 = sand.u32 %s26, 1
        %s114 = smul.addr %s113, 16
        %s115 = scalar_lea.vmem [#allocation2], %s114
        // Predicated region
        $region25: #{tpu_custom_call.1} parent=23 // pred_check
          %p116 = pneg %p39
        $region26: #{tpu_custom_call.1} parent=23 // pred_check_branch
          %118 = sbr.rel (%p116) target = $region28
        $region27: #{tpu_custom_call.1} parent=23 // pred_region
          %120 = dma.done %s112, 256
        $region28: #{tpu_custom_call.1} parent=23 // pred_fallthru
          _
        %s121 = sand.u32 %s26, 1
        %s122 = scalar_lea.sflag [#allocation3], %s121
        %s123 = sand.u32 %s26, 1
        %s124 = smul.addr %s123, 16
        %s125 = scalar_lea.vmem [#allocation2], %s124
        %p126 = pneg %p39
        %p127 = pneg %p36
        %p128 = pneg %p65
        %p129 = pneg %p62
        %s130 = sand.u32 %s52, 1
        %s131 = scalar_lea.sflag [#allocation4], %s130
        %s132 = sand.u32 %s52, 1
        %s133 = smul.addr %s132, 4
        %s134 = scalar_lea.vmem [#allocation5], %s133
        %s135 = smul.u32 4, %s18
        %s136 = smul.u32 4, %s18
        %v137 = vld [vmem:[%s115] sm:$0xff]
        %v138 = vld [vmem:[%s115 + $0x8] sm:$0xff]
        %141 = vst [vmem:[#allocation1] ss:$2 sm:$0xff] %v137
        %s142 = scalar_lea.vmem [#allocation1], 16
        %143 = vst [vmem:[%s142] ss:$2 sm:$0xff] %v138
        %v144 = vld.sshfl [vmem:[#allocation1] sm:$0xff pattern:$0x75316420]
        %v145 = vld.sshfl [vmem:[#allocation1 + $0x8] sm:$0xff pattern:$0x75316420]
        %v146 = vld.sshfl [vmem:[#allocation1 + $0x10] sm:$0xff pattern:$0x75316420]
        %v147 = vld.sshfl [vmem:[#allocation1 + $0x18] sm:$0xff pattern:$0x75316420]
        %vm152 = vcmask 1043456
        %v153 = vsel %vm152, %v144, 0.0
        %v154 = vrot.slane %v153, 4
        %v155 = vadd.f32 %v153, %v154
        %v156 = vrot.slane %v155, 2
        %v157 = vadd.f32 %v155, %v156
        %v158 = vrot.slane %v157, 1
        %v159 = vadd.f32 %v157, %v158
        %v160 = vsel %vm152, %v145, 0.0
        %v161 = vrot.slane %v160, 4
        %v162 = vadd.f32 %v160, %v161
        %v163 = vrot.slane %v162, 2
        %v164 = vadd.f32 %v162, %v163
        %v165 = vrot.slane %v164, 1
        %v166 = vadd.f32 %v164, %v165
        %v167 = vsel %vm152, %v146, 0.0
        %v168 = vrot.slane %v167, 4
        %v169 = vadd.f32 %v167, %v168
        %v170 = vrot.slane %v169, 2
        %v171 = vadd.f32 %v169, %v170
        %v172 = vrot.slane %v171, 1
        %v173 = vadd.f32 %v171, %v172
        %v174 = vsel %vm152, %v147, 0.0
        %v175 = vrot.slane %v174, 4
        %v176 = vadd.f32 %v174, %v175
        %v177 = vrot.slane %v176, 2
        %v178 = vadd.f32 %v176, %v177
        %v179 = vrot.slane %v178, 1
        %v180 = vadd.f32 %v178, %v179
        %v185 = vrot.slane %v166, 7
        %v186 = vrot.slane %v173, 6
        %v187 = vrot.slane %v180, 5
        %vm188 = vcmask 1040384
        %v189 = vsel %vm188, %v159, %v185
        %vm190 = vcmask 1042434
        %v191 = vsel %vm190, %v186, %v187
        %vm192 = vcmask 1041408
        %v193 = vsel %vm192, %v189, %v191
        %v195 = vlaneseq
        %vm196 = vcmp.ge.s32.totalorder %v195, 0
        %vm197 = vcmp.lt.s32.totalorder %v195, 512
        %vm198 = vmand %vm196, %vm197
        %199 = vst.msk [vmem:[%s134] sm:$0xf] %vm198, %v193
        %s200 = sand.u32 %s52, 1
        %s201 = scalar_lea.sflag [#allocation4], %s200
        %s202 = sand.u32 %s52, 1
        %s203 = smul.addr %s202, 4
        %s204 = scalar_lea.vmem [#allocation5], %s203
        // Predicated region
        $region29: #{tpu_custom_call.1} parent=23 // pred_check
          %p205 = pneg %p62
        $region30: #{tpu_custom_call.1} parent=23 // pred_check_branch
          %207 = sbr.rel (%p205) target = $region32
        $region31: #{tpu_custom_call.1} parent=23 // pred_region
          %s208 = smul.u32 4, %s18
          %210 = vsyncadd %s201, 0
          %s211 = scalar_lea.hbm %s1, %s208
          %s213 = sshll.u32 %s204, 4
          %s214 = int_to_ptr.vmem [resolvable:$true] %s213
          %s215 = sshll.u32 %s211, 4
          %s216 = int_to_ptr.hbm [resolvable:$true] %s215
          %218 = dma.vmem_to_hbm [thread:$0]  %s214, 64, %s216, %s201
        $region32: #{tpu_custom_call.1} parent=23 // pred_fallthru
          _
      $region24: #{tpu_custom_call.1} parent=5 // pred_fallthru
        _
      %p219 = scmp.le.s32.totalorder 2, %s13
      // Predicated region
      $region33: #{tpu_custom_call.1} parent=5 // pred_check
        %p220 = pneg %p219
      $region34: #{tpu_custom_call.1} parent=5 // pred_check_branch
        %222 = sbr.rel (%p220) target = $region36
      $region35: #{tpu_custom_call.1} parent=5 // pred_region
        %s223 = ssub.s32 %s13, 2
        // Predicated region
        $region37: #{tpu_custom_call.1} parent=35 // pred_check
          %p224 = pneg %p68
        $region38: #{tpu_custom_call.1} parent=35 // pred_check_branch
          %226 = sbr.rel (%p224) target = $region40
        $region39: #{tpu_custom_call.1} parent=35 // pred_region
          %s227 = sand.u32 %s53, 1
          %s228 = scalar_lea.sflag [#allocation4], %s227
          %s229 = sand.u32 %s53, 1
          %s230 = smul.addr %s229, 4
          %s231 = scalar_lea.vmem [#allocation5], %s230
          %233 = dma.done %s228, 64
        $region40: #{tpu_custom_call.1} parent=35 // pred_fallthru
          _
      $region36: #{tpu_custom_call.1} parent=5 // pred_fallthru
        _
    $region6: #{tpu_custom_call.1} parent=1 // loop_footer
      %s17 = sadd.s32 1, %s13
    $region7: #{tpu_custom_call.1} parent=1 // loop_footer_branch
      %12 = sbr.rel target = $region3
    $region8: #{tpu_custom_call.1} parent=1 // loop_exit
      _
    %234 = vsyncpa [#allocation3], 1
    %s235 = scalar_lea.sflag [#allocation3], 1
    %236 = vsyncpa %s235, 1
    %237 = vsyncpa [#allocation4], 1
    %s238 = scalar_lea.sflag [#allocation4], 1
    %239 = vsyncpa %s238, 1

</llo_original>
